<compile_context>
chip_gen: v7x
topology: tpu7x:2x2x1
jax: 0.10.0
libtpu: 0.0.40
codegen_flags: <defaults>
</compile_context>

<pallas_src>
import functools

import jax
import jax.numpy as jnp
from jax.experimental import pallas as pl
from jax.experimental.pallas import tpu as pltpu

G = 4  # params['g_order']

_K_TARGET = 128                    # MXU contraction depth target; 128 fits v5e exactly
                                   # (v6e/v7x could use 256 -- their MXU K is 256 deep).
_VMEM_BUDGET = 24 * 1024 * 1024    # double-buffered working-set cap (all generations)
_MIN_OUT_BLOCK = 32 * 1024         # don't shrink blocks below this when splitting for megacore


# ------------------------- Pallas kernel -------------------------

def _dw_up_kernel(x_ref, r_ref, f_ref, o_ref, *, n_chunks, hi_lo):
    # x_ref: (tc, n_chunks*K)   input rows; each K-lane chunk = g_r full W-wide rows
    # r_ref: (K, 4K)            constant bf16 0/1 lane-expansion matrix (per chunk)
    # f_ref: (tc, 4K)           f32 per-channel 2x2 filter tiled along the 4K output lanes
    # o_ref: (tc, n_chunks*4K)  output; bit-identical layout to (2H, 2W) per image
    kk = r_ref.shape[0]
    ko = r_ref.shape[1]                       # 4 * K
    r = r_ref[...]                            # hoisted, loaded once per tile
    f = f_ref[...]
    for q in range(n_chunks):                 # small static unroll (n_chunks <= 8)
        xq = x_ref[:, q * kk:(q + 1) * kk]    # 128-lane-aligned static slice
        if hi_lo:
            # 2-pass hi/lo split: ~2^-17 rel error on the pass-through (R is exact 0/1),
            # vs 6 bf16 MXU passes for Precision.HIGHEST.
            x_hi = xq.astype(jnp.bfloat16)
            x_lo = (xq - x_hi.astype(jnp.float32)).astype(jnp.bfloat16)
            xu = jnp.dot(x_hi, r, preferred_element_type=jnp.float32)
            xu = xu + jnp.dot(x_lo, r, preferred_element_type=jnp.float32)
        else:
            xu = jnp.dot(xq.astype(jnp.bfloat16), r, preferred_element_type=jnp.float32)
        # Per-channel filter multiply (VPU) and a 4K-lane, lane-aligned unmasked store.
        o_ref[:, q * ko:(q + 1) * ko] = (xu * f).astype(o_ref.dtype)


# ------------------------- filter construction (plain JAX glue) -------------------------

def build_dw_filters(dw, delta, g=G):
    # torch: stack([rot90(dw, (4//g)*i) for i in range(g)], dim=1).view(c2*g,1,k,k) + delta
    assert g in (2, 4), "only the rot90 branch of rot_n is implemented"
    # TODO(synk): rot_n's torchvision-rotate branch (g not in {2, 4}) is not implemented.
    rots = jnp.stack([jnp.rot90(dw, (4 // g) * i, axes=(-2, -1)) for i in range(g)],
                     axis=1)                                        # (c2, g, k, k)
    return rots.reshape(-1, dw.shape[-2], dw.shape[-1]) + delta     # (c2*g, k, k)


def _divisors(n):
    return [d for d in range(1, n + 1) if n % d == 0]


# ------------------------- forward -------------------------

def depthwise_rre_up(x, dw, delta, *, g=G):
    """x: (B, c2, g, H, W) -> (B, c2, g, 2H, 2W); depthwise conv_transpose2d k=2,s=2,p=0."""
    B, c2, g_, H, W = x.shape
    assert g_ == g
    C = c2 * g
    N = B * C

    f = build_dw_filters(dw, delta, g).astype(jnp.float32)          # (C, 2, 2)

    # ---- chunking: group g_r complete rows so the MXU contraction is ~K_TARGET lanes ----
    g_r = max(d for d in _divisors(H) if d <= max(1, _K_TARGET // W))
    K = g_r * W                      # contraction depth per chunk
    KO = 4 * K
    Hc = H // g_r                    # K-lane chunks per image
    L = H * W                        # flattened input lanes per image (= Hc * K)

    # Per-channel filter tiled along the KO output lanes:
    #   f_lane[c, r*4W + kh*2W + 2j + kw] = f[c, kh, kw]   (independent of r, j)
    f4w = jnp.tile(f[:, :, None, :], (1, 1, W, 1)).reshape(C, 4 * W)
    f_lane = jnp.tile(f4w, (1, g_r))                                 # (C, 4K)

    # bf16 0/1 lane-expansion matrix (exact): R[r*W + j, r*4W + kh*2W + 2j + kw] = 1
    col = jnp.arange(KO)
    src = (col // (4 * W)) * W + (col % (2 * W)) // 2
    R = (src[None, :] == jnp.arange(K)[:, None]).astype(jnp.bfloat16)  # (K, 4K)

    # Lane-dense views: (N, L) == (N, H, W) and (N, 4L) == (N, 2H, 2W) bit-identically.
    x2 = x.reshape(N, L)

    # ---- tile selection ----
    if C % 8 == 0:
        per_row_filter = False
        f_arr = f_lane                                               # (C, 4K)
        tc_cands = [d for d in _divisors(C) if d % 8 == 0]
    else:
        # Fallback: pre-tile the filter per (batch, channel) row so row blocks stay legal.
        per_row_filter = True
        f_arr = jnp.tile(f_lane, (B, 1))                             # (N, 4K)
        cands = [d for d in _divisors(N) if d % 8 == 0]
        tc_cands = cands if cands else [N]

    if K % 128 == 0:
        tch_cands = [d for d in _divisors(Hc) if d <= 8]   # cap static in-kernel unroll
    else:
        tch_cands = [Hc]   # lane block must equal the full lane dim to stay layout-legal

    def step_bytes(tc_, tch_):
        tl_ = tch_ * K
        return tc_ * tl_ * 4 + tc_ * 4 * tl_ * 4 + tc_ * KO * 4     # in + out + filter (f32)

    r_bytes = K * KO * 2
    best = None
    for tcc in tc_cands:
        for tchc in tch_cands:
            if 2 * step_bytes(tcc, tchc) + 2 * r_bytes <= _VMEM_BUDGET:
                sb = step_bytes(tcc, tchc)
                if best is None or sb > best[0]:
                    best = (sb, tcc, tchc)
    if best is None:                         # pathological huge block: take the smallest
        tc, tch = min(tc_cands), min(tch_cands)
    else:
        _, tc, tch = best

    # v7x megacore: ensure >= 4 blocks along the "parallel" axes when we can afford it.
    def grid_pts(tc_, tch_):
        return (N // tc_) * (Hc // tch_)

    while grid_pts(tc, tch) < 4:
        tc_smaller = [d for d in tc_cands if d < tc]
        tch_smaller = [d for d in tch_cands if d < tch]
        nxt = None
        if tc_smaller and (max(tc_smaller) * 4 * tch * K * 4 >= _MIN_OUT_BLOCK
                           or not tch_smaller):
            nxt = (max(tc_smaller), tch)
        elif tch_smaller:
            nxt = (tc, max(tch_smaller))
        if nxt is None:
            break
        tc, tch = nxt

    tl = tch * K
    grid = (N // tc, Hc // tch)

    need = 2 * step_bytes(tc, tch) + 2 * r_bytes
    vmem_limit = None if need <= _VMEM_BUDGET else int(need + (4 << 20))

    if per_row_filter:
        f_index = lambda n, q: (n, 0)
    else:
        cpb = C // tc                               # channel blocks per image
        f_index = lambda n, q: (n % cpb, 0)

    kernel = functools.partial(_dw_up_kernel, n_chunks=tch,
                               hi_lo=(x.dtype == jnp.float32))

    out = pl.pallas_call(
        kernel,
        out_shape=jax.ShapeDtypeStruct((N, 4 * L), x.dtype),
        grid_spec=pltpu.PrefetchScalarGridSpec(
            num_scalar_prefetch=0,
            grid=grid,
            in_specs=[
                pl.BlockSpec((tc, tl), lambda n, q: (n, q)),
                pl.BlockSpec((K, KO), lambda n, q: (0, 0)),
                pl.BlockSpec((tc, KO), f_index),
            ],
            out_specs=pl.BlockSpec((tc, 4 * tl), lambda n, q: (n, q)),
        ),
        compiler_params=pltpu.CompilerParams(
            dimension_semantics=("parallel", "parallel"),
            vmem_limit_bytes=vmem_limit),
    )(x2, R, f_arr)

    # (N, 4*H*W) is bit-identical to (N, 2H, 2W): free reshape back to module layout.
    return out.reshape(B, c2, g, 2 * H, 2 * W)


def reference_forward(x, dw, delta, g=G):
    # Independent pure-JAX reference of conv_transpose2d(k=2, s=2, p=0, groups=C).
    B, c2, g_, H, W = x.shape
    C = c2 * g_
    f = build_dw_filters(dw, delta, g_)                               # (C, 2, 2)
    xf = x.reshape(B, C, H, W)
    out = jnp.einsum('bchw,ckl->bchkwl', xf, f)                       # scatter form
    return out.reshape(B, c2, g_, 2 * H, 2 * W)


# ------------------------- main -------------------------

if __name__ == "__main__":
    B, c2, H, W = 2, 8, 16, 16          # c1 == c2 (module asserts), g = 4

    key = jax.random.PRNGKey(0)
    kx, kdw = jax.random.split(key, 2)

    # kaiming_uniform_(a=sqrt(5)) on (c2, 1, 2, 2): bound = 1/sqrt(fan_in) = 1/2
    dw = jax.random.uniform(kdw, (c2, 2, 2), jnp.float32, -0.5, 0.5)
    delta = jnp.zeros((c2 * G, 2, 2), jnp.float32)   # module initializes delta to zeros
    x = jax.random.normal(kx, (B, c2, G, H, W), jnp.float32)

    out = jax.block_until_ready(depthwise_rre_up(x, dw, delta))
    ref = jax.block_until_ready(reference_forward(x, dw, delta))

    assert out.shape == (B, c2, G, 2 * H, 2 * W), out.shape
    assert jnp.allclose(out, ref, atol=1e-4, rtol=1e-4), float(jnp.max(jnp.abs(out - ref)))
    print("KERNEL_OK")
</pallas_src>

<mosaic_0001>
module attributes {stable_mosaic.version = 11 : i64} {
  func.func @_dw_up_kernel(%arg0: i32, %arg1: i32, %arg2: memref<16x256xf32, #tpu.memory_space<vmem>>, %arg3: memref<128x512xbf16, #tpu.memory_space<vmem>>, %arg4: memref<16x512xf32, #tpu.memory_space<vmem>>, %arg5: memref<16x1024xf32, #tpu.memory_space<vmem>>) attributes {dimension_semantics = [#tpu.dimension_semantics<parallel>, #tpu.dimension_semantics<parallel>], iteration_bounds = array<i64: 4, 1>, scalar_prefetch = 0 : i64, scratch_operands = 0 : i64, tpu.core_type = #tpu.core_type<tc>, window_params = [{transform_indices = @transform_0, window_bounds = array<i64: 16, 256>}, {pipeline_mode = #tpu.pipeline_mode<synchronous>, transform_indices = @transform_1, window_bounds = array<i64: 128, 512>}, {transform_indices = @transform_2, window_bounds = array<i64: 16, 512>}, {transform_indices = @transform_3, window_bounds = array<i64: 16, 1024>}]} {
    %c0 = arith.constant 0 : index
    %c0_0 = arith.constant 0 : index
    %0 = vector.load %arg3[%c0, %c0_0] : memref<128x512xbf16, #tpu.memory_space<vmem>>, vector<128x512xbf16>
    %c0_1 = arith.constant 0 : index
    %c0_2 = arith.constant 0 : index
    %1 = vector.load %arg4[%c0_1, %c0_2] : memref<16x512xf32, #tpu.memory_space<vmem>>, vector<16x512xf32>
    %c0_3 = arith.constant 0 : index
    %c0_4 = arith.constant 0 : index
    %2 = vector.load %arg2[%c0_3, %c0_4] : memref<16x256xf32, #tpu.memory_space<vmem>>, vector<16x128xf32>
    %3 = arith.truncf %2 : vector<16x128xf32> to vector<16x128xbf16>
    %4 = arith.extf %3 : vector<16x128xbf16> to vector<16x128xf32>
    %5 = arith.subf %2, %4 : vector<16x128xf32>
    %6 = arith.truncf %5 : vector<16x128xf32> to vector<16x128xbf16>
    %cst = arith.constant dense<0.000000e+00> : vector<16x512xf32>
    %7 = tpu.matmul %3, %0, %cst {dimension_numbers = #tpu.dot_dimension_numbers<[1], [0], [0], [1], [0, 0, 1, 1], [], []>} : vector<16x128xbf16>, vector<128x512xbf16>, vector<16x512xf32> -> vector<16x512xf32>
    %cst_5 = arith.constant dense<0.000000e+00> : vector<16x512xf32>
    %8 = tpu.matmul %6, %0, %cst_5 {dimension_numbers = #tpu.dot_dimension_numbers<[1], [0], [0], [1], [0, 0, 1, 1], [], []>} : vector<16x128xbf16>, vector<128x512xbf16>, vector<16x512xf32> -> vector<16x512xf32>
    %9 = arith.addf %7, %8 : vector<16x512xf32>
    %10 = arith.mulf %9, %1 : vector<16x512xf32>
    %c0_6 = arith.constant 0 : index
    %c0_7 = arith.constant 0 : index
    %11 = vector.load %arg5[%c0_6, %c0_7] : memref<16x1024xf32, #tpu.memory_space<vmem>>, vector<16x512xf32>
    tpu.vector_store %arg5[%c0_6, %c0_7], %10 {strides = array<i32>} : memref<16x1024xf32, #tpu.memory_space<vmem>>, vector<16x512xf32>,
    %c0_8 = arith.constant 0 : index
    %c128 = arith.constant 128 : index
    %12 = vector.load %arg2[%c0_8, %c128] : memref<16x256xf32, #tpu.memory_space<vmem>>, vector<16x128xf32>
    %13 = arith.truncf %12 : vector<16x128xf32> to vector<16x128xbf16>
    %14 = arith.extf %13 : vector<16x128xbf16> to vector<16x128xf32>
    %15 = arith.subf %12, %14 : vector<16x128xf32>
    %16 = arith.truncf %15 : vector<16x128xf32> to vector<16x128xbf16>
    %cst_9 = arith.constant dense<0.000000e+00> : vector<16x512xf32>
    %17 = tpu.matmul %13, %0, %cst_9 {dimension_numbers = #tpu.dot_dimension_numbers<[1], [0], [0], [1], [0, 0, 1, 1], [], []>} : vector<16x128xbf16>, vector<128x512xbf16>, vector<16x512xf32> -> vector<16x512xf32>
    %cst_10 = arith.constant dense<0.000000e+00> : vector<16x512xf32>
    %18 = tpu.matmul %16, %0, %cst_10 {dimension_numbers = #tpu.dot_dimension_numbers<[1], [0], [0], [1], [0, 0, 1, 1], [], []>} : vector<16x128xbf16>, vector<128x512xbf16>, vector<16x512xf32> -> vector<16x512xf32>
    %19 = arith.addf %17, %18 : vector<16x512xf32>
    %20 = arith.mulf %19, %1 : vector<16x512xf32>
    %c0_11 = arith.constant 0 : index
    %c512 = arith.constant 512 : index
    %21 = vector.load %arg5[%c0_11, %c512] : memref<16x1024xf32, #tpu.memory_space<vmem>>, vector<16x512xf32>
    tpu.vector_store %arg5[%c0_11, %c512], %20 {strides = array<i32>} : memref<16x1024xf32, #tpu.memory_space<vmem>>, vector<16x512xf32>,
    return
  }
  func.func @transform_0(%arg0: i32, %arg1: i32) -> (i32, i32) {
    %c0_i32 = arith.constant 0 : i32
    return %arg0, %arg1 : i32, i32
  }
  func.func @transform_1(%arg0: i32, %arg1: i32) -> (i32, i32) {
    %c0_i32 = arith.constant 0 : i32
    %c0_i32_0 = arith.constant 0 : i32
    %c0_i32_1 = arith.constant 0 : i32
    return %c0_i32, %c0_i32_0 : i32, i32
  }
  func.func @transform_2(%arg0: i32, %arg1: i32) -> (i32, i32) {
    %c2_i32 = arith.constant 2 : i32
    %c0_i32 = arith.constant 0 : i32
    %0 = arith.cmpi eq, %c2_i32, %c0_i32 : i32
    %c1_i32 = arith.constant 1 : i32
    %1 = arith.select %0, %c1_i32, %c2_i32 : i32
    %2 = arith.remsi %arg0, %1 : i32
    %c0_i32_0 = arith.constant 0 : i32
    %3 = arith.cmpi ne, %2, %c0_i32_0 : i32
    %c0_i32_1 = arith.constant 0 : i32
    %4 = arith.cmpi slt, %2, %c0_i32_1 : i32
    %c0_i32_2 = arith.constant 0 : i32
    %5 = arith.cmpi slt, %1, %c0_i32_2 : i32
    %6 = arith.xori %4, %5 : i1
    %7 = arith.andi %6, %3 : i1
    %8 = arith.addi %2, %1 : i32
    %9 = arith.select %7, %8, %2 : i32
    %c0_i32_3 = arith.constant 0 : i32
    %c0_i32_4 = arith.constant 0 : i32
    return %9, %c0_i32_3 : i32, i32
  }
  func.func @transform_3(%arg0: i32, %arg1: i32) -> (i32, i32) {
    %c0_i32 = arith.constant 0 : i32
    return %arg0, %arg1 : i32, i32
  }
}

</mosaic_0001>

<llo_original>
// kernel: tpu_custom_call.1
$region0: #{tpu_custom_call.1}
  #allocation0 [shape = 'u32[]', space=smem, size = 0x4, offset = 0x4, fixed_abs, tag = 'smem constant byte address 0x4 - core index']
  #allocation1 [shape = 'u32[144,128]{1,0:T(1,128)}', space=vmem, size = 0x12000, scoped, tag = 'internal scratch']
  %s0 = inlined_call_operand.hbm [shape: f32[64,256], index: 0, kind: input, shape index: {}]
  %s1 = inlined_call_operand.hbm [shape: bf16[128,512], index: 1, kind: input, shape index: {}]
  %s2 = inlined_call_operand.hbm [shape: f32[32,512], index: 2, kind: input, shape index: {}]
  %s3 = inlined_call_operand.hbm [shape: f32[64,1024], index: 3, kind: output, shape index: {}]
  %s4 = sld [smem:[#allocation0]]
  $region57: #{tpu_custom_call.1} parent=0
    _
  %s6 = ssub.s32 1, %s4
  %s7 = scalar_select 0, %s6, %s4
  $region1: #{tpu_custom_call.1} parent=0
    #allocation2 [shape = 'u8[32768]{0}', space=vmem, size = 0x8000, scoped, tag = 'input window, operand 0']
    #allocation3 [shape = 's32[2]{0}', space=sflag, size = 0x8, scoped, tag = 'scoped memory for tpu_custom_call.1']
    #allocation4 [shape = 's32[2]{0}', space=sflag, size = 0x8, scoped, tag = 'scoped memory for tpu_custom_call.1']
    #allocation5 [shape = 'u8[131072]{0}', space=vmem, size = 0x20000, scoped, tag = 'input window, operand 1, single buffered']
    #allocation6 [shape = 's32[1]{0}', space=sflag, size = 0x4, scoped, tag = 'scoped memory for tpu_custom_call.1']
    #allocation7 [shape = 'u8[65536]{0}', space=vmem, size = 0x10000, scoped, tag = 'input window, operand 2']
    #allocation8 [shape = 'u8[131072]{0}', space=vmem, size = 0x20000, scoped, tag = 'output window, operand 0']
    %8 = vsyncpa [#allocation3], 0
    %s9 = scalar_lea.sflag [#allocation3], 1
    %10 = vsyncpa %s9, 0
    %11 = vsyncpa [#allocation6], 0
    %12 = vsyncpa [#allocation4], 0
    %s13 = scalar_lea.sflag [#allocation4], 1
    %14 = vsyncpa %s13, 0
    loop: start=0, step=1, limit=6
    $region2: #{tpu_custom_call.1} parent=1 // loop_pre_header
      _
    $region3: #{tpu_custom_call.1} parent=1 // loop_header
      %s16 = sphi 0, %s20
      %p17 = scmp.ge.s32.totalorder %s16, 6
      %s23 = sphi 0, %s35
      %s24 = sphi 0, %s31
      %s25 = sphi 0, %s23
      %s26 = sphi 0, %s24
      %s27 = sphi 0, %s25
      %s28 = sphi 0, %s26
      %s40 = sphi 0, %s42
      %s43 = sphi 0, %s40
      %s44 = sphi 0, %s43
      %s60 = sphi 0, %s44
      %s64 = sphi 0, %s64
      %s66 = sphi 0, %s64
      %s67 = sphi 0, %s66
      %s81 = sphi 0, %s67
      %s111 = sphi 0, %s113
      %s114 = sphi 0, %s111
      %s115 = sphi 0, %s114
      %s131 = sphi 0, %s115
      %s139 = sphi 0, %s141
      %s142 = sphi 0, %s139
      %s143 = sphi 0, %s142
      %s159 = sphi 0, %s143
    $region4: #{tpu_custom_call.1} parent=1 // loop_header_branch
      %19 = sbr.rel (%p17) target = $region8
    $region5: #{tpu_custom_call.1} parent=1 // loop_body
      %s21 = ssub.s32 %s16, 1
      %s22 = ssub.s32 %s16, 2
      %s29 = sadd.s32 1, %s24
      %p30 = scmp.ge.s32.totalorder %s29, 1
      %s31 = scalar_select %p30, 0, %s29
      %s32 = sadd.s32 1, %s23
      %s33 = scalar_select %p30, %s32, %s23
      %p34 = scmp.ge.s32.totalorder %s33, 4
      %s35 = scalar_select %p34, 0, %s33
      %s36 = ssub.s32 %s23, %s35
      %s37 = ssub.s32 %s24, %s31
      %s38 = sor.u32 %s36, %s37
      %p39 = scmp.eq.s32.totalorder %s38, 0
      %s41 = sadd.s32 %s40, 1
      %s42 = scalar_select %p39, %s40, %s41
      %p45 = pneg %p39
      %p46 = scmp.eq.s32.totalorder %s16, 3
      %p47 = por %p45, %p46
      %p48 = scmp.ne.s32.totalorder %s40, %s43
      %p49 = scmp.eq.s32.totalorder %s16, 0
      %p50 = por %p48, %p49
      %p51 = scmp.ne.s32.totalorder %s40, %s43
      %p52 = scmp.eq.s32.totalorder %s21, 3
      %p53 = por %p51, %p52
      %p54 = scmp.ne.s32.totalorder %s43, %s44
      %p55 = scmp.eq.s32.totalorder %s21, 0
      %p56 = por %p54, %p55
      %p57 = scmp.ne.s32.totalorder %s43, %s44
      %p58 = scmp.eq.s32.totalorder %s22, 3
      %p59 = por %p57, %p58
      %p61 = scmp.ne.s32.totalorder %s44, %s60
      %p62 = scmp.eq.s32.totalorder %s22, 0
      %p63 = por %p61, %p62
      %s65 = sadd.s32 %s64, 1
      %p68 = scmp.eq.s32.totalorder %s16, 3
      %p69 = scmp.ne.s32.totalorder %s64, %s66
      %p70 = scmp.eq.s32.totalorder %s16, 0
      %p71 = por %p69, %p70
      %p72 = scmp.ne.s32.totalorder %s64, %s66
      %p73 = scmp.eq.s32.totalorder %s21, 3
      %p74 = por %p72, %p73
      %p75 = scmp.ne.s32.totalorder %s66, %s67
      %p76 = scmp.eq.s32.totalorder %s21, 0
      %p77 = por %p75, %p76
      %p78 = scmp.ne.s32.totalorder %s66, %s67
      %p79 = scmp.eq.s32.totalorder %s22, 3
      %p80 = por %p78, %p79
      %p82 = scmp.ne.s32.totalorder %s67, %s81
      %p83 = scmp.eq.s32.totalorder %s22, 0
      %p84 = por %p82, %p83
      %p85 = scmp.lt.s32.totalorder %s23, 0
      %s86 = ssub.s32 0, %s23
      %s87 = scalar_select %p85, %s86, %s23
      %s88 = sand.u32 %s87, 1
      %s89 = ssub.s32 0, %s88
      %s90 = scalar_select %p85, %s89, %s88
      %p91 = scmp.ne.s32.totalorder %s90, 0
      %p92 = scmp.lt.s32.totalorder %s90, 0
      %p93 = pnand %p92, %p91
      %p94 = pneg %p93
      %s95 = sadd.s32 %s90, 2
      %s96 = scalar_select %p94, %s95, %s90
      %p97 = scmp.lt.s32.totalorder %s35, 0
      %s98 = ssub.s32 0, %s35
      %s99 = scalar_select %p97, %s98, %s35
      %s100 = sand.u32 %s99, 1
      %s101 = ssub.s32 0, %s100
      %s102 = scalar_select %p97, %s101, %s100
      %p103 = scmp.ne.s32.totalorder %s102, 0
      %p104 = scmp.lt.s32.totalorder %s102, 0
      %p105 = pnand %p104, %p103
      %p106 = pneg %p105
      %s107 = sadd.s32 %s102, 2
      %s108 = scalar_select %p106, %s107, %s102
      %s109 = ssub.s32 %s96, %s108
      %p110 = scmp.eq.s32.totalorder %s109, 0
      %s112 = sadd.s32 %s111, 1
      %s113 = scalar_select %p110, %s111, %s112
      %p116 = pneg %p110
      %p117 = scmp.eq.s32.totalorder %s16, 3
      %p118 = por %p116, %p117
      %p119 = scmp.ne.s32.totalorder %s111, %s114
      %p120 = scmp.eq.s32.totalorder %s16, 0
      %p121 = por %p119, %p120
      %p122 = scmp.ne.s32.totalorder %s111, %s114
      %p123 = scmp.eq.s32.totalorder %s21, 3
      %p124 = por %p122, %p123
      %p125 = scmp.ne.s32.totalorder %s114, %s115
      %p126 = scmp.eq.s32.totalorder %s21, 0
      %p127 = por %p125, %p126
      %p128 = scmp.ne.s32.totalorder %s114, %s115
      %p129 = scmp.eq.s32.totalorder %s22, 3
      %p130 = por %p128, %p129
      %p132 = scmp.ne.s32.totalorder %s115, %s131
      %p133 = scmp.eq.s32.totalorder %s22, 0
      %p134 = por %p132, %p133
      %s135 = ssub.s32 %s23, %s35
      %s136 = ssub.s32 %s24, %s31
      %s137 = sor.u32 %s135, %s136
      %p138 = scmp.eq.s32.totalorder %s137, 0
      %s140 = sadd.s32 %s139, 1
      %s141 = scalar_select %p138, %s139, %s140
      %p144 = pneg %p138
      %p145 = scmp.eq.s32.totalorder %s16, 3
      %p146 = por %p144, %p145
      %p147 = scmp.ne.s32.totalorder %s139, %s142
      %p148 = scmp.eq.s32.totalorder %s16, 0
      %p149 = por %p147, %p148
      %p150 = scmp.ne.s32.totalorder %s139, %s142
      %p151 = scmp.eq.s32.totalorder %s21, 3
      %p152 = por %p150, %p151
      %p153 = scmp.ne.s32.totalorder %s142, %s143
      %p154 = scmp.eq.s32.totalorder %s21, 0
      %p155 = por %p153, %p154
      %p156 = scmp.ne.s32.totalorder %s142, %s143
      %p157 = scmp.eq.s32.totalorder %s22, 3
      %p158 = por %p156, %p157
      %p160 = scmp.ne.s32.totalorder %s143, %s159
      %p161 = scmp.eq.s32.totalorder %s22, 0
      %p162 = por %p160, %p161
      %p163 = scmp.le.s32.totalorder 1, %s16
      %p164 = scmp.lt.s32.totalorder %s16, 5
      %p165 = pnand %p163, %p164
      %p166 = pneg %p165
      // Predicated region
      $region9: #{tpu_custom_call.1} parent=5 // pred_check
        _
      $region10: #{tpu_custom_call.1} parent=5 // pred_check_branch
        %168 = sbr.rel (%p165) target = $region12
      $region11: #{tpu_custom_call.1} parent=5 // pred_region
        %s169 = ssub.s32 %s16, 1
        // Predicated region
        $region13: #{tpu_custom_call.1} parent=11 // pred_check
          %p170 = pneg %p77
        $region14: #{tpu_custom_call.1} parent=11 // pred_check_branch
          %172 = sbr.rel (%p170) target = $region16
        $region15: #{tpu_custom_call.1} parent=11 // pred_region
          %s174 = ssub.s32 4096, 4096
          %175 = vsyncadd [#allocation6], %s174
          %s176 = sshll.u32 [#allocation5], 4
          %s177 = int_to_ptr.vmem [resolvable:$true] %s176
          %182 = dma.hbm_to_vmem [thread:$0]  %s1, 4096, %s177, [#allocation6], 256, 256, 16
        $region16: #{tpu_custom_call.1} parent=11 // pred_fallthru
          _
      $region12: #{tpu_custom_call.1} parent=5 // pred_fallthru
        _
      %p183 = scmp.lt.s32.totalorder %s16, 4
      // Predicated region
      $region17: #{tpu_custom_call.1} parent=5 // pred_check
        %p184 = pneg %p183
      $region18: #{tpu_custom_call.1} parent=5 // pred_check_branch
        %186 = sbr.rel (%p184) target = $region20
      $region19: #{tpu_custom_call.1} parent=5 // pred_region
        // Predicated region
        $region21: #{tpu_custom_call.1} parent=19 // pred_check
          %p187 = pneg %p50
        $region22: #{tpu_custom_call.1} parent=19 // pred_check_branch
          %189 = sbr.rel (%p187) target = $region24
        $region23: #{tpu_custom_call.1} parent=19 // pred_region
          %s190 = sand.u32 %s16, 1
          %s191 = scalar_lea.sflag [#allocation3], %s190
          %s192 = sand.u32 %s40, 1
          %s193 = smul.addr %s192, 32
          %s194 = scalar_lea.vmem [#allocation2], %s193
          %s195 = smul.u32 2, %s23
          %s196 = smul.u32 2, %s24
          %s198 = ssub.s32 512, 512
          %199 = vsyncadd %s191, %s198
          %s200 = smul.addr %s195, 2
          %s201 = sadd.s32 %s196, %s200
          %s202 = smul.addr %s201, 128
          %s203 = scalar_lea.hbm %s0, %s202
          %s204 = sshll.u32 %s194, 4
          %s205 = int_to_ptr.vmem [resolvable:$true] %s204
          %210 = dma.hbm_to_vmem [thread:$0]  %s203, 512, %s205, %s191, 256, 256, 16
        $region24: #{tpu_custom_call.1} parent=19 // pred_fallthru
          _
        // Predicated region
        $region25: #{tpu_custom_call.1} parent=19 // pred_check
          %p211 = pneg %p121
        $region26: #{tpu_custom_call.1} parent=19 // pred_check_branch
          %213 = sbr.rel (%p211) target = $region28
        $region27: #{tpu_custom_call.1} parent=19 // pred_region
          %s214 = sand.u32 %s16, 1
          %s215 = scalar_lea.sflag [#allocation3], %s214
          %s216 = sand.u32 %s111, 1
          %s217 = smul.addr %s216, 64
          %s218 = scalar_lea.vmem [#allocation7], %s217
          %p219 = scmp.lt.s32.totalorder %s23, 0
          %s220 = ssub.s32 0, %s23
          %s221 = scalar_select %p219, %s220, %s23
          %s222 = sand.u32 %s221, 1
          %s223 = ssub.s32 0, %s222
          %s224 = scalar_select %p219, %s223, %s222
          %p225 = scmp.ne.s32.totalorder %s224, 0
          %p226 = scmp.lt.s32.totalorder %s224, 0
          %p227 = pnand %p226, %p225
          %p228 = pneg %p227
          %s229 = sadd.s32 %s224, 2
          %s230 = scalar_select %p228, %s229, %s224
          %s231 = smul.u32 2, %s230
          %s233 = ssub.s32 1024, 1024
          %234 = vsyncadd %s215, %s233
          %s235 = smul.addr %s231, 4
          %s236 = smul.addr %s235, 128
          %s237 = scalar_lea.hbm %s2, %s236
          %s238 = sshll.u32 %s218, 4
          %s239 = int_to_ptr.vmem [resolvable:$true] %s238
          %244 = dma.hbm_to_vmem [thread:$0]  %s237, 1024, %s239, %s215, 512, 512, 32
        $region28: #{tpu_custom_call.1} parent=19 // pred_fallthru
          _
      $region20: #{tpu_custom_call.1} parent=5 // pred_fallthru
        _
      %p245 = scmp.le.s32.totalorder 1, %s16
      %p246 = scmp.lt.s32.totalorder %s16, 5
      %p247 = pnand %p245, %p246
      %p248 = pneg %p247
      // Predicated region
      $region29: #{tpu_custom_call.1} parent=5 // pred_check
        _
      $region30: #{tpu_custom_call.1} parent=5 // pred_check_branch
        %250 = sbr.rel (%p247) target = $region32
      $region31: #{tpu_custom_call.1} parent=5 // pred_region
        %s251 = ssub.s32 %s16, 1
        %s252 = sand.u32 %s21, 1
        %s253 = scalar_lea.sflag [#allocation3], %s252
        %s254 = sand.u32 %s43, 1
        %s255 = smul.addr %s254, 32
        %s256 = scalar_lea.vmem [#allocation2], %s255
        // Predicated region
        $region33: #{tpu_custom_call.1} parent=31 // pred_check
          %p257 = pneg %p56
        $region34: #{tpu_custom_call.1} parent=31 // pred_check_branch
          %259 = sbr.rel (%p257) target = $region36
        $region35: #{tpu_custom_call.1} parent=31 // pred_region
          %260 = dma.done %s253, 512
        $region36: #{tpu_custom_call.1} parent=31 // pred_fallthru
          _
        // Predicated region
        $region37: #{tpu_custom_call.1} parent=31 // pred_check
          %p261 = pneg %p77
        $region38: #{tpu_custom_call.1} parent=31 // pred_check_branch
          %263 = sbr.rel (%p261) target = $region40
        $region39: #{tpu_custom_call.1} parent=31 // pred_region
          %264 = dma.done [#allocation6], 4096
        $region40: #{tpu_custom_call.1} parent=31 // pred_fallthru
          _
        %s265 = sand.u32 %s21, 1
        %s266 = scalar_lea.sflag [#allocation3], %s265
        %s267 = sand.u32 %s114, 1
        %s268 = smul.addr %s267, 64
        %s269 = scalar_lea.vmem [#allocation7], %s268
        // Predicated region
        $region41: #{tpu_custom_call.1} parent=31 // pred_check
          %p270 = pneg %p127
        $region42: #{tpu_custom_call.1} parent=31 // pred_check_branch
          %272 = sbr.rel (%p270) target = $region44
        $region43: #{tpu_custom_call.1} parent=31 // pred_region
          %273 = dma.done %s266, 1024
        $region44: #{tpu_custom_call.1} parent=31 // pred_fallthru
          _
        %s274 = sand.u32 %s21, 1
        %s275 = scalar_lea.sflag [#allocation3], %s274
        %s276 = sand.u32 %s43, 1
        %s277 = smul.addr %s276, 32
        %s278 = scalar_lea.vmem [#allocation2], %s277
        %p279 = pneg %p56
        %p280 = pneg %p53
        %p281 = pneg %p77
        %p282 = pneg %p74
        %s283 = sand.u32 %s21, 1
        %s284 = scalar_lea.sflag [#allocation3], %s283
        %s285 = sand.u32 %s114, 1
        %s286 = smul.addr %s285, 64
        %s287 = scalar_lea.vmem [#allocation7], %s286
        %p288 = pneg %p127
        %p289 = pneg %p124
        %p290 = pneg %p155
        %p291 = pneg %p152
        %s292 = sand.u32 %s142, 1
        %s293 = scalar_lea.sflag [#allocation4], %s292
        %s294 = sand.u32 %s142, 1
        %s295 = smul.addr %s294, 128
        %s296 = scalar_lea.vmem [#allocation8], %s295
        %s297 = smul.u32 2, %s25
        %s298 = smul.u32 2, %s26
        %p299 = scmp.lt.s32.totalorder %s25, 0
        %s300 = ssub.s32 0, %s25
        %s301 = scalar_select %p299, %s300, %s25
        %s302 = sand.u32 %s301, 1
        %s303 = ssub.s32 0, %s302
        %s304 = scalar_select %p299, %s303, %s302
        %p305 = scmp.ne.s32.totalorder %s304, 0
        %p306 = scmp.lt.s32.totalorder %s304, 0
        %p307 = pnand %p306, %p305
        %p308 = pneg %p307
        %s309 = sadd.s32 %s304, 2
        %s310 = scalar_select %p308, %s309, %s304
        %s311 = smul.u32 2, %s310
        %s312 = smul.u32 2, %s25
        %s313 = smul.u32 8, %s26
        %v315 = vld [vmem:[#allocation5] sm:$0xff]
        %v316 = vld [vmem:[#allocation5 + $0x8] sm:$0xff]
        %v317 = vld [vmem:[#allocation5 + $0x10] sm:$0xff]
        %v318 = vld [vmem:[#allocation5 + $0x18] sm:$0xff]
        %v319 = vld [vmem:[#allocation5 + $0x20] sm:$0xff]
        %v320 = vld [vmem:[#allocation5 + $0x28] sm:$0xff]
        %v321 = vld [vmem:[#allocation5 + $0x30] sm:$0xff]
        %v322 = vld [vmem:[#allocation5 + $0x38] sm:$0xff]
        %v323 = vld [vmem:[#allocation5 + $0x40] sm:$0xff]
        %v324 = vld [vmem:[#allocation5 + $0x48] sm:$0xff]
        %v325 = vld [vmem:[#allocation5 + $0x50] sm:$0xff]
        %v326 = vld [vmem:[#allocation5 + $0x58] sm:$0xff]
        %v327 = vld [vmem:[#allocation5 + $0x60] sm:$0xff]
        %v328 = vld [vmem:[#allocation5 + $0x68] sm:$0xff]
        %v329 = vld [vmem:[#allocation5 + $0x70] sm:$0xff]
        %v330 = vld [vmem:[#allocation5 + $0x78] sm:$0xff]
        %v331 = vld [vmem:[#allocation5 + $0x80] sm:$0xff]
        %v332 = vld [vmem:[#allocation5 + $0x88] sm:$0xff]
        %v333 = vld [vmem:[#allocation5 + $0x90] sm:$0xff]
        %v334 = vld [vmem:[#allocation5 + $0x98] sm:$0xff]
        %v335 = vld [vmem:[#allocation5 + $0xa0] sm:$0xff]
        %v336 = vld [vmem:[#allocation5 + $0xa8] sm:$0xff]
        %v337 = vld [vmem:[#allocation5 + $0xb0] sm:$0xff]
        %v338 = vld [vmem:[#allocation5 + $0xb8] sm:$0xff]
        %v339 = vld [vmem:[#allocation5 + $0xc0] sm:$0xff]
        %v340 = vld [vmem:[#allocation5 + $0xc8] sm:$0xff]
        %v341 = vld [vmem:[#allocation5 + $0xd0] sm:$0xff]
        %v342 = vld [vmem:[#allocation5 + $0xd8] sm:$0xff]
        %v343 = vld [vmem:[#allocation5 + $0xe0] sm:$0xff]
        %v344 = vld [vmem:[#allocation5 + $0xe8] sm:$0xff]
        %v345 = vld [vmem:[#allocation5 + $0xf0] sm:$0xff]
        %v346 = vld [vmem:[#allocation5 + $0xf8] sm:$0xff]
        %v347 = vld [vmem:[%s269] sm:$0xff]
        %v348 = vld [vmem:[%s269 + $0x8] sm:$0xff]
        %v349 = vld [vmem:[%s269 + $0x10] sm:$0xff]
        %v350 = vld [vmem:[%s269 + $0x18] sm:$0xff]
        %v351 = vld [vmem:[%s269 + $0x20] sm:$0xff]
        %v352 = vld [vmem:[%s269 + $0x28] sm:$0xff]
        %v353 = vld [vmem:[%s269 + $0x30] sm:$0xff]
        %v354 = vld [vmem:[%s269 + $0x38] sm:$0xff]
        %v355 = vld [vmem:[%s256] sm:$0xff]
        %v356 = vld [vmem:[%s256 + $0x10] sm:$0xff]
        %v357 = vpack.c.bf16 %v356, %v355
        %v358 = vunpack.c.l.bf16 %v357
        %v359 = vunpack.c.h.bf16 %v357
        %v360 = vsub.f32 %v355, %v358
        %v361 = vsub.f32 %v356, %v359
        %v362 = vpack.c.bf16 %v361, %v360
        %v395 = vunpack.c.l.b16 %v315
        %v396 = vunpack.c.h.b16 %v315
        %v397 = vunpack.c.l.b16 %v316
        %v398 = vunpack.c.h.b16 %v316
        %v399 = vunpack.c.l.b16 %v317
        %v400 = vunpack.c.h.b16 %v317
        %v401 = vunpack.c.l.b16 %v318
        %v402 = vunpack.c.h.b16 %v318
        %v403 = vunpack.c.l.b16 %v319
        %v404 = vunpack.c.h.b16 %v319
        %v405 = vunpack.c.l.b16 %v320
        %v406 = vunpack.c.h.b16 %v320
        %v407 = vunpack.c.l.b16 %v321
        %v408 = vunpack.c.h.b16 %v321
        %v409 = vunpack.c.l.b16 %v322
        %v410 = vunpack.c.h.b16 %v322
        %v411 = vunpack.c.l.b16 %v323
        %v412 = vunpack.c.h.b16 %v323
        %v413 = vunpack.c.l.b16 %v324
        %v414 = vunpack.c.h.b16 %v324
        %v415 = vunpack.c.l.b16 %v325
        %v416 = vunpack.c.h.b16 %v325
        %v417 = vunpack.c.l.b16 %v326
        %v418 = vunpack.c.h.b16 %v326
        %v419 = vunpack.c.l.b16 %v327
        %v420 = vunpack.c.h.b16 %v327
        %v421 = vunpack.c.l.b16 %v328
        %v422 = vunpack.c.h.b16 %v328
        %v423 = vunpack.c.l.b16 %v329
        %v424 = vunpack.c.h.b16 %v329
        %v425 = vunpack.c.l.b16 %v330
        %v426 = vunpack.c.h.b16 %v330
        %v427 = vunpack.c.l.b16 %v331
        %v428 = vunpack.c.h.b16 %v331
        %v429 = vunpack.c.l.b16 %v332
        %v430 = vunpack.c.h.b16 %v332
        %v431 = vunpack.c.l.b16 %v333
        %v432 = vunpack.c.h.b16 %v333
        %v433 = vunpack.c.l.b16 %v334
        %v434 = vunpack.c.h.b16 %v334
        %v435 = vunpack.c.l.b16 %v335
        %v436 = vunpack.c.h.b16 %v335
        %v437 = vunpack.c.l.b16 %v336
        %v438 = vunpack.c.h.b16 %v336
        %v439 = vunpack.c.l.b16 %v337
        %v440 = vunpack.c.h.b16 %v337
        %v441 = vunpack.c.l.b16 %v338
        %v442 = vunpack.c.h.b16 %v338
        %v443 = vunpack.c.l.b16 %v339
        %v444 = vunpack.c.h.b16 %v339
        %v445 = vunpack.c.l.b16 %v340
        %v446 = vunpack.c.h.b16 %v340
        %v447 = vunpack.c.l.b16 %v341
        %v448 = vunpack.c.h.b16 %v341
        %v449 = vunpack.c.l.b16 %v342
        %v450 = vunpack.c.h.b16 %v342
        %v451 = vunpack.c.l.b16 %v343
        %v452 = vunpack.c.h.b16 %v343
        %v453 = vunpack.c.l.b16 %v344
        %v454 = vunpack.c.h.b16 %v344
        %v455 = vunpack.c.l.b16 %v345
        %v456 = vunpack.c.h.b16 %v345
        %v457 = vunpack.c.l.b16 %v346
        %v458 = vunpack.c.h.b16 %v346
        %v459 = vpack.c.b16 %v399, %v395
        %v460 = vpack.c.b16 %v400, %v396
        %v461 = vpack.c.b16 %v401, %v397
        %v462 = vpack.c.b16 %v402, %v398
        %v463 = vpack.c.b16 %v407, %v403
        %v464 = vpack.c.b16 %v408, %v404
        %v465 = vpack.c.b16 %v409, %v405
        %v466 = vpack.c.b16 %v410, %v406
        %v467 = vpack.c.b16 %v415, %v411
        %v468 = vpack.c.b16 %v416, %v412
        %v469 = vpack.c.b16 %v417, %v413
        %v470 = vpack.c.b16 %v418, %v414
        %v471 = vpack.c.b16 %v423, %v419
        %v472 = vpack.c.b16 %v424, %v420
        %v473 = vpack.c.b16 %v425, %v421
        %v474 = vpack.c.b16 %v426, %v422
        %v475 = vpack.c.b16 %v431, %v427
        %v476 = vpack.c.b16 %v432, %v428
        %v477 = vpack.c.b16 %v433, %v429
        %v478 = vpack.c.b16 %v434, %v430
        %v479 = vpack.c.b16 %v439, %v435
        %v480 = vpack.c.b16 %v440, %v436
        %v481 = vpack.c.b16 %v441, %v437
        %v482 = vpack.c.b16 %v442, %v438
        %v483 = vpack.c.b16 %v447, %v443
        %v484 = vpack.c.b16 %v448, %v444
        %v485 = vpack.c.b16 %v449, %v445
        %v486 = vpack.c.b16 %v450, %v446
        %v487 = vpack.c.b16 %v455, %v451
        %v488 = vpack.c.b16 %v456, %v452
        %v489 = vpack.c.b16 %v457, %v453
        %v490 = vpack.c.b16 %v458, %v454
        %523 = vmatprep.subr.bf16.mxu0 %v460
        %524 = vmatpush1.bf16.msra.mxu0 %v459
        %525 = vmatprep.subr.bf16.mxu0 %v464
        %526 = vmatpush1.bf16.msra.mxu0 %v463
        %527 = vmatprep.subr.bf16.mxu0 %v468
        %528 = vmatpush1.bf16.msra.mxu0 %v467
        %529 = vmatprep.subr.bf16.mxu0 %v472
        %530 = vmatpush1.bf16.msra.mxu0 %v471
        %531 = vmatprep.subr.bf16.mxu0 %v476
        %532 = vmatpush1.bf16.msra.mxu0 %v475
        %533 = vmatprep.subr.bf16.mxu0 %v480
        %534 = vmatpush1.bf16.msra.mxu0 %v479
        %535 = vmatprep.subr.bf16.mxu0 %v484
        %536 = vmatpush1.bf16.msra.mxu0 %v483
        %537 = vmatprep.subr.bf16.mxu0 %v488
        %538 = vmatpush1.bf16.msra.mxu0 %v487
        %539 = vmatprep.subr.bf16.mxu0 0
        %540 = vmatpush1.bf16.msra.mxu0 0
        %541 = vmatprep.subr.bf16.mxu0 0
        %542 = vmatpush1.bf16.msra.mxu0 0
        %543 = vmatprep.subr.bf16.mxu0 0
        %544 = vmatpush1.bf16.msra.mxu0 0
        %545 = vmatprep.subr.bf16.mxu0 0
        %546 = vmatpush1.bf16.msra.mxu0 0
        %547 = vmatprep.subr.bf16.mxu0 0
        %548 = vmatpush1.bf16.msra.mxu0 0
        %549 = vmatprep.subr.bf16.mxu0 0
        %550 = vmatpush1.bf16.msra.mxu0 0
        %551 = vmatprep.subr.bf16.mxu0 0
        %552 = vmatpush1.bf16.msra.mxu0 0
        %553 = vmatprep.subr.bf16.mxu0 0
        %554 = vmatpush1.bf16.msra.mxu0 0
        %555 = vmatprep.mubr.bf16.mxu0 0
        %556 = vmatmul.mubr.bf16.gmra.mrb[0].mxu0 %v362
        %v557 = vpop.f32.mrb[0].mxu0
        %v558 = vadd.f32 0.0, %v557
        %v559 = vpop.f32.mrb[0].mxu0
        %v560 = vadd.f32 0.0, %v559
        %v561 = vpop.f32.mrb[0].mxu0
        %v562 = vadd.f32 0.0, %v561
        %v563 = vpop.f32.mrb[0].mxu0
        %v564 = vadd.f32 0.0, %v563
        %565 = vdwg.mxu0
        %566 = vmatprep.subr.bf16.mxu0 %v462
        %567 = vmatpush1.bf16.msra.mxu0 %v461
        %568 = vmatprep.subr.bf16.mxu0 %v466
        %569 = vmatpush1.bf16.msra.mxu0 %v465
        %570 = vmatprep.subr.bf16.mxu0 %v470
        %571 = vmatpush1.bf16.msra.mxu0 %v469
        %572 = vmatprep.subr.bf16.mxu0 %v474
        %573 = vmatpush1.bf16.msra.mxu0 %v473
        %574 = vmatprep.subr.bf16.mxu0 %v478
        %575 = vmatpush1.bf16.msra.mxu0 %v477
        %576 = vmatprep.subr.bf16.mxu0 %v482
        %577 = vmatpush1.bf16.msra.mxu0 %v481
        %578 = vmatprep.subr.bf16.mxu0 %v486
        %579 = vmatpush1.bf16.msra.mxu0 %v485
        %580 = vmatprep.subr.bf16.mxu0 %v490
        %581 = vmatpush1.bf16.msra.mxu0 %v489
        %582 = vmatprep.subr.bf16.mxu0 0
        %583 = vmatpush1.bf16.msra.mxu0 0
        %584 = vmatprep.subr.bf16.mxu0 0
        %585 = vmatpush1.bf16.msra.mxu0 0
        %586 = vmatprep.subr.bf16.mxu0 0
        %587 = vmatpush1.bf16.msra.mxu0 0
        %588 = vmatprep.subr.bf16.mxu0 0
        %589 = vmatpush1.bf16.msra.mxu0 0
        %590 = vmatprep.subr.bf16.mxu0 0
        %591 = vmatpush1.bf16.msra.mxu0 0
        %592 = vmatprep.subr.bf16.mxu0 0
        %593 = vmatpush1.bf16.msra.mxu0 0
        %594 = vmatprep.subr.bf16.mxu0 0
        %595 = vmatpush1.bf16.msra.mxu0 0
        %596 = vmatprep.subr.bf16.mxu0 0
        %597 = vmatpush1.bf16.msra.mxu0 0
        %598 = vmatprep.mubr.bf16.mxu0 0
        %599 = vmatmul.mubr.bf16.gmra.mrb[0].mxu0 %v362
        %v600 = vpop.f32.mrb[0].mxu0
        %v601 = vadd.f32 0.0, %v600
        %v602 = vpop.f32.mrb[0].mxu0
        %v603 = vadd.f32 0.0, %v602
        %v604 = vpop.f32.mrb[0].mxu0
        %v605 = vadd.f32 0.0, %v604
        %v606 = vpop.f32.mrb[0].mxu0
        %v607 = vadd.f32 0.0, %v606
        %608 = vdwg.mxu0
        %609 = vmatprep.subr.bf16.mxu0 %v460
        %610 = vmatpush1.bf16.msra.mxu0 %v459
        %611 = vmatprep.subr.bf16.mxu0 %v464
        %612 = vmatpush1.bf16.msra.mxu0 %v463
        %613 = vmatprep.subr.bf16.mxu0 %v468
        %614 = vmatpush1.bf16.msra.mxu0 %v467
        %615 = vmatprep.subr.bf16.mxu0 %v472
        %616 = vmatpush1.bf16.msra.mxu0 %v471
        %617 = vmatprep.subr.bf16.mxu0 %v476
        %618 = vmatpush1.bf16.msra.mxu0 %v475
        %619 = vmatprep.subr.bf16.mxu0 %v480
        %620 = vmatpush1.bf16.msra.mxu0 %v479
        %621 = vmatprep.subr.bf16.mxu0 %v484
        %622 = vmatpush1.bf16.msra.mxu0 %v483
        %623 = vmatprep.subr.bf16.mxu0 %v488
        %624 = vmatpush1.bf16.msra.mxu0 %v487
        %625 = vmatprep.subr.bf16.mxu0 0
        %626 = vmatpush1.bf16.msra.mxu0 0
        %627 = vmatprep.subr.bf16.mxu0 0
        %628 = vmatpush1.bf16.msra.mxu0 0
        %629 = vmatprep.subr.bf16.mxu0 0
        %630 = vmatpush1.bf16.msra.mxu0 0
        %631 = vmatprep.subr.bf16.mxu0 0
        %632 = vmatpush1.bf16.msra.mxu0 0
        %633 = vmatprep.subr.bf16.mxu0 0
        %634 = vmatpush1.bf16.msra.mxu0 0
        %635 = vmatprep.subr.bf16.mxu0 0
        %636 = vmatpush1.bf16.msra.mxu0 0
        %637 = vmatprep.subr.bf16.mxu0 0
        %638 = vmatpush1.bf16.msra.mxu0 0
        %639 = vmatprep.subr.bf16.mxu0 0
        %640 = vmatpush1.bf16.msra.mxu0 0
        %641 = vmatprep.mubr.bf16.mxu0 0
        %642 = vmatmul.mubr.bf16.gmra.mrb[0].mxu0 %v357
        %v643 = vpop.f32.mrb[0].mxu0
        %v644 = vadd.f32 %v558, %v643
        %v645 = vpop.f32.mrb[0].mxu0
        %v646 = vadd.f32 %v560, %v645
        %v647 = vpop.f32.mrb[0].mxu0
        %v648 = vadd.f32 %v562, %v647
        %v649 = vpop.f32.mrb[0].mxu0
        %v650 = vadd.f32 %v564, %v649
        %651 = vdwg.mxu0
        %652 = vmatprep.subr.bf16.mxu0 %v462
        %653 = vmatpush1.bf16.msra.mxu0 %v461
        %654 = vmatprep.subr.bf16.mxu0 %v466
        %655 = vmatpush1.bf16.msra.mxu0 %v465
        %656 = vmatprep.subr.bf16.mxu0 %v470
        %657 = vmatpush1.bf16.msra.mxu0 %v469
        %658 = vmatprep.subr.bf16.mxu0 %v474
        %659 = vmatpush1.bf16.msra.mxu0 %v473
        %660 = vmatprep.subr.bf16.mxu0 %v478
        %661 = vmatpush1.bf16.msra.mxu0 %v477
        %662 = vmatprep.subr.bf16.mxu0 %v482
        %663 = vmatpush1.bf16.msra.mxu0 %v481
        %664 = vmatprep.subr.bf16.mxu0 %v486
        %665 = vmatpush1.bf16.msra.mxu0 %v485
        %666 = vmatprep.subr.bf16.mxu0 %v490
        %667 = vmatpush1.bf16.msra.mxu0 %v489
        %668 = vmatprep.subr.bf16.mxu0 0
        %669 = vmatpush1.bf16.msra.mxu0 0
        %670 = vmatprep.subr.bf16.mxu0 0
        %671 = vmatpush1.bf16.msra.mxu0 0
        %672 = vmatprep.subr.bf16.mxu0 0
        %673 = vmatpush1.bf16.msra.mxu0 0
        %674 = vmatprep.subr.bf16.mxu0 0
        %675 = vmatpush1.bf16.msra.mxu0 0
        %676 = vmatprep.subr.bf16.mxu0 0
        %677 = vmatpush1.bf16.msra.mxu0 0
        %678 = vmatprep.subr.bf16.mxu0 0
        %679 = vmatpush1.bf16.msra.mxu0 0
        %680 = vmatprep.subr.bf16.mxu0 0
        %681 = vmatpush1.bf16.msra.mxu0 0
        %682 = vmatprep.subr.bf16.mxu0 0
        %683 = vmatpush1.bf16.msra.mxu0 0
        %684 = vmatprep.mubr.bf16.mxu0 0
        %685 = vmatmul.mubr.bf16.gmra.mrb[0].mxu0 %v357
        %v686 = vpop.f32.mrb[0].mxu0
        %v687 = vadd.f32 %v601, %v686
        %v688 = vpop.f32.mrb[0].mxu0
        %v689 = vadd.f32 %v603, %v688
        %v690 = vpop.f32.mrb[0].mxu0
        %v691 = vadd.f32 %v605, %v690
        %v692 = vpop.f32.mrb[0].mxu0
        %v693 = vadd.f32 %v607, %v692
        %694 = vdwg.mxu0
        %v695 = vmul.f32 %v644, %v347
        %v696 = vmul.f32 %v646, %v348
        %v697 = vmul.f32 %v687, %v349
        %v698 = vmul.f32 %v689, %v350
        %v699 = vmul.f32 %v648, %v351
        %v700 = vmul.f32 %v650, %v352
        %v701 = vmul.f32 %v691, %v353
        %v702 = vmul.f32 %v693, %v354
        %703 = vst [vmem:[%s296] sm:$0xff] %v695
        %704 = vst [vmem:[%s296 + $0x8] sm:$0xff] %v696
        %705 = vst [vmem:[%s296 + $0x10] sm:$0xff] %v697
        %706 = vst [vmem:[%s296 + $0x18] sm:$0xff] %v698
        %707 = vst [vmem:[%s296 + $0x40] sm:$0xff] %v699
        %708 = vst [vmem:[%s296 + $0x48] sm:$0xff] %v700
        %709 = vst [vmem:[%s296 + $0x50] sm:$0xff] %v701
        %710 = vst [vmem:[%s296 + $0x58] sm:$0xff] %v702
        %v711 = vld [vmem:[%s256 + $0x8] sm:$0xff]
        %v712 = vld [vmem:[%s256 + $0x18] sm:$0xff]
        %v713 = vpack.c.bf16 %v712, %v711
        %v714 = vunpack.c.l.bf16 %v713
        %v715 = vunpack.c.h.bf16 %v713
        %v716 = vsub.f32 %v711, %v714
        %v717 = vsub.f32 %v712, %v715
        %v718 = vpack.c.bf16 %v717, %v716
        %719 = vmatprep.subr.bf16.mxu0 %v460
        %720 = vmatpush1.bf16.msra.mxu0 %v459
        %721 = vmatprep.subr.bf16.mxu0 %v464
        %722 = vmatpush1.bf16.msra.mxu0 %v463
        %723 = vmatprep.subr.bf16.mxu0 %v468
        %724 = vmatpush1.bf16.msra.mxu0 %v467
        %725 = vmatprep.subr.bf16.mxu0 %v472
        %726 = vmatpush1.bf16.msra.mxu0 %v471
        %727 = vmatprep.subr.bf16.mxu0 %v476
        %728 = vmatpush1.bf16.msra.mxu0 %v475
        %729 = vmatprep.subr.bf16.mxu0 %v480
        %730 = vmatpush1.bf16.msra.mxu0 %v479
        %731 = vmatprep.subr.bf16.mxu0 %v484
        %732 = vmatpush1.bf16.msra.mxu0 %v483
        %733 = vmatprep.subr.bf16.mxu0 %v488
        %734 = vmatpush1.bf16.msra.mxu0 %v487
        %735 = vmatprep.subr.bf16.mxu0 0
        %736 = vmatpush1.bf16.msra.mxu0 0
        %737 = vmatprep.subr.bf16.mxu0 0
        %738 = vmatpush1.bf16.msra.mxu0 0
        %739 = vmatprep.subr.bf16.mxu0 0
        %740 = vmatpush1.bf16.msra.mxu0 0
        %741 = vmatprep.subr.bf16.mxu0 0
        %742 = vmatpush1.bf16.msra.mxu0 0
        %743 = vmatprep.subr.bf16.mxu0 0
        %744 = vmatpush1.bf16.msra.mxu0 0
        %745 = vmatprep.subr.bf16.mxu0 0
        %746 = vmatpush1.bf16.msra.mxu0 0
        %747 = vmatprep.subr.bf16.mxu0 0
        %748 = vmatpush1.bf16.msra.mxu0 0
        %749 = vmatprep.subr.bf16.mxu0 0
        %750 = vmatpush1.bf16.msra.mxu0 0
        %751 = vmatprep.mubr.bf16.mxu0 0
        %752 = vmatmul.mubr.bf16.gmra.mrb[0].mxu0 %v718
        %v753 = vpop.f32.mrb[0].mxu0
        %v754 = vadd.f32 0.0, %v753
        %v755 = vpop.f32.mrb[0].mxu0
        %v756 = vadd.f32 0.0, %v755
        %v757 = vpop.f32.mrb[0].mxu0
        %v758 = vadd.f32 0.0, %v757
        %v759 = vpop.f32.mrb[0].mxu0
        %v760 = vadd.f32 0.0, %v759
        %761 = vdwg.mxu0
        %762 = vmatprep.subr.bf16.mxu0 %v462
        %763 = vmatpush1.bf16.msra.mxu0 %v461
        %764 = vmatprep.subr.bf16.mxu0 %v466
        %765 = vmatpush1.bf16.msra.mxu0 %v465
        %766 = vmatprep.subr.bf16.mxu0 %v470
        %767 = vmatpush1.bf16.msra.mxu0 %v469
        %768 = vmatprep.subr.bf16.mxu0 %v474
        %769 = vmatpush1.bf16.msra.mxu0 %v473
        %770 = vmatprep.subr.bf16.mxu0 %v478
        %771 = vmatpush1.bf16.msra.mxu0 %v477
        %772 = vmatprep.subr.bf16.mxu0 %v482
        %773 = vmatpush1.bf16.msra.mxu0 %v481
        %774 = vmatprep.subr.bf16.mxu0 %v486
        %775 = vmatpush1.bf16.msra.mxu0 %v485
        %776 = vmatprep.subr.bf16.mxu0 %v490
        %777 = vmatpush1.bf16.msra.mxu0 %v489
        %778 = vmatprep.subr.bf16.mxu0 0
        %779 = vmatpush1.bf16.msra.mxu0 0
        %780 = vmatprep.subr.bf16.mxu0 0
        %781 = vmatpush1.bf16.msra.mxu0 0
        %782 = vmatprep.subr.bf16.mxu0 0
        %783 = vmatpush1.bf16.msra.mxu0 0
        %784 = vmatprep.subr.bf16.mxu0 0
        %785 = vmatpush1.bf16.msra.mxu0 0
        %786 = vmatprep.subr.bf16.mxu0 0
        %787 = vmatpush1.bf16.msra.mxu0 0
        %788 = vmatprep.subr.bf16.mxu0 0
        %789 = vmatpush1.bf16.msra.mxu0 0
        %790 = vmatprep.subr.bf16.mxu0 0
        %791 = vmatpush1.bf16.msra.mxu0 0
        %792 = vmatprep.subr.bf16.mxu0 0
        %793 = vmatpush1.bf16.msra.mxu0 0
        %794 = vmatprep.mubr.bf16.mxu0 0
        %795 = vmatmul.mubr.bf16.gmra.mrb[0].mxu0 %v718
        %v796 = vpop.f32.mrb[0].mxu0
        %v797 = vadd.f32 0.0, %v796
        %v798 = vpop.f32.mrb[0].mxu0
        %v799 = vadd.f32 0.0, %v798
        %v800 = vpop.f32.mrb[0].mxu0
        %v801 = vadd.f32 0.0, %v800
        %v802 = vpop.f32.mrb[0].mxu0
        %v803 = vadd.f32 0.0, %v802
        %804 = vdwg.mxu0
        %805 = vmatprep.subr.bf16.mxu0 %v460
        %806 = vmatpush1.bf16.msra.mxu0 %v459
        %807 = vmatprep.subr.bf16.mxu0 %v464
        %808 = vmatpush1.bf16.msra.mxu0 %v463
        %809 = vmatprep.subr.bf16.mxu0 %v468
        %810 = vmatpush1.bf16.msra.mxu0 %v467
        %811 = vmatprep.subr.bf16.mxu0 %v472
        %812 = vmatpush1.bf16.msra.mxu0 %v471
        %813 = vmatprep.subr.bf16.mxu0 %v476
        %814 = vmatpush1.bf16.msra.mxu0 %v475
        %815 = vmatprep.subr.bf16.mxu0 %v480
        %816 = vmatpush1.bf16.msra.mxu0 %v479
        %817 = vmatprep.subr.bf16.mxu0 %v484
        %818 = vmatpush1.bf16.msra.mxu0 %v483
        %819 = vmatprep.subr.bf16.mxu0 %v488
        %820 = vmatpush1.bf16.msra.mxu0 %v487
        %821 = vmatprep.subr.bf16.mxu0 0
        %822 = vmatpush1.bf16.msra.mxu0 0
        %823 = vmatprep.subr.bf16.mxu0 0
        %824 = vmatpush1.bf16.msra.mxu0 0
        %825 = vmatprep.subr.bf16.mxu0 0
        %826 = vmatpush1.bf16.msra.mxu0 0
        %827 = vmatprep.subr.bf16.mxu0 0
        %828 = vmatpush1.bf16.msra.mxu0 0
        %829 = vmatprep.subr.bf16.mxu0 0
        %830 = vmatpush1.bf16.msra.mxu0 0
        %831 = vmatprep.subr.bf16.mxu0 0
        %832 = vmatpush1.bf16.msra.mxu0 0
        %833 = vmatprep.subr.bf16.mxu0 0
        %834 = vmatpush1.bf16.msra.mxu0 0
        %835 = vmatprep.subr.bf16.mxu0 0
        %836 = vmatpush1.bf16.msra.mxu0 0
        %837 = vmatprep.mubr.bf16.mxu0 0
        %838 = vmatmul.mubr.bf16.gmra.mrb[0].mxu0 %v713
        %v839 = vpop.f32.mrb[0].mxu0
        %v840 = vadd.f32 %v754, %v839
        %v841 = vpop.f32.mrb[0].mxu0
        %v842 = vadd.f32 %v756, %v841
        %v843 = vpop.f32.mrb[0].mxu0
        %v844 = vadd.f32 %v758, %v843
        %v845 = vpop.f32.mrb[0].mxu0
        %v846 = vadd.f32 %v760, %v845
        %847 = vdwg.mxu0
        %848 = vmatprep.subr.bf16.mxu0 %v462
        %849 = vmatpush1.bf16.msra.mxu0 %v461
        %850 = vmatprep.subr.bf16.mxu0 %v466
        %851 = vmatpush1.bf16.msra.mxu0 %v465
        %852 = vmatprep.subr.bf16.mxu0 %v470
        %853 = vmatpush1.bf16.msra.mxu0 %v469
        %854 = vmatprep.subr.bf16.mxu0 %v474
        %855 = vmatpush1.bf16.msra.mxu0 %v473
        %856 = vmatprep.subr.bf16.mxu0 %v478
        %857 = vmatpush1.bf16.msra.mxu0 %v477
        %858 = vmatprep.subr.bf16.mxu0 %v482
        %859 = vmatpush1.bf16.msra.mxu0 %v481
        %860 = vmatprep.subr.bf16.mxu0 %v486
        %861 = vmatpush1.bf16.msra.mxu0 %v485
        %862 = vmatprep.subr.bf16.mxu0 %v490
        %863 = vmatpush1.bf16.msra.mxu0 %v489
        %864 = vmatprep.subr.bf16.mxu0 0
        %865 = vmatpush1.bf16.msra.mxu0 0
        %866 = vmatprep.subr.bf16.mxu0 0
        %867 = vmatpush1.bf16.msra.mxu0 0
        %868 = vmatprep.subr.bf16.mxu0 0
        %869 = vmatpush1.bf16.msra.mxu0 0
        %870 = vmatprep.subr.bf16.mxu0 0
        %871 = vmatpush1.bf16.msra.mxu0 0
        %872 = vmatprep.subr.bf16.mxu0 0
        %873 = vmatpush1.bf16.msra.mxu0 0
        %874 = vmatprep.subr.bf16.mxu0 0
        %875 = vmatpush1.bf16.msra.mxu0 0
        %876 = vmatprep.subr.bf16.mxu0 0
        %877 = vmatpush1.bf16.msra.mxu0 0
        %878 = vmatprep.subr.bf16.mxu0 0
        %879 = vmatpush1.bf16.msra.mxu0 0
        %880 = vmatprep.mubr.bf16.mxu0 0
        %881 = vmatmul.mubr.bf16.gmra.mrb[0].mxu0 %v713
        %v882 = vpop.f32.mrb[0].mxu0
        %v883 = vadd.f32 %v797, %v882
        %v884 = vpop.f32.mrb[0].mxu0
        %v885 = vadd.f32 %v799, %v884
        %v886 = vpop.f32.mrb[0].mxu0
        %v887 = vadd.f32 %v801, %v886
        %v888 = vpop.f32.mrb[0].mxu0
        %v889 = vadd.f32 %v803, %v888
        %890 = vdwg.mxu0
        %v891 = vmul.f32 %v840, %v347
        %v892 = vmul.f32 %v842, %v348
        %v893 = vmul.f32 %v883, %v349
        %v894 = vmul.f32 %v885, %v350
        %v895 = vmul.f32 %v844, %v351
        %v896 = vmul.f32 %v846, %v352
        %v897 = vmul.f32 %v887, %v353
        %v898 = vmul.f32 %v889, %v354
        %899 = vst [vmem:[%s296 + $0x20] sm:$0xff] %v891
        %900 = vst [vmem:[%s296 + $0x28] sm:$0xff] %v892
        %901 = vst [vmem:[%s296 + $0x30] sm:$0xff] %v893
        %902 = vst [vmem:[%s296 + $0x38] sm:$0xff] %v894
        %903 = vst [vmem:[%s296 + $0x60] sm:$0xff] %v895
        %904 = vst [vmem:[%s296 + $0x68] sm:$0xff] %v896
        %905 = vst [vmem:[%s296 + $0x70] sm:$0xff] %v897
        %906 = vst [vmem:[%s296 + $0x78] sm:$0xff] %v898
        %s907 = sand.u32 %s142, 1
        %s908 = scalar_lea.sflag [#allocation4], %s907
        %s909 = sand.u32 %s142, 1
        %s910 = smul.addr %s909, 128
        %s911 = scalar_lea.vmem [#allocation8], %s910
        // Predicated region
        $region45: #{tpu_custom_call.1} parent=31 // pred_check
          %p912 = pneg %p152
        $region46: #{tpu_custom_call.1} parent=31 // pred_check_branch
          %914 = sbr.rel (%p912) target = $region48
        $region47: #{tpu_custom_call.1} parent=31 // pred_region
          %s915 = smul.u32 2, %s25
          %s916 = smul.u32 8, %s26
          %s918 = ssub.s32 2048, 2048
          %919 = vsyncadd %s908, %s918
          %s920 = smul.addr %s915, 8
          %s921 = sadd.s32 %s916, %s920
          %s922 = smul.addr %s921, 128
          %s923 = scalar_lea.hbm %s3, %s922
          %s924 = sshll.u32 %s911, 4
          %s925 = int_to_ptr.vmem [resolvable:$true] %s924
          %930 = dma.vmem_to_hbm [thread:$0]  %s925, 2048, %s923, %s908, 1024, 1024, 64
        $region48: #{tpu_custom_call.1} parent=31 // pred_fallthru
          _
      $region32: #{tpu_custom_call.1} parent=5 // pred_fallthru
        _
      %p931 = scmp.le.s32.totalorder 2, %s16
      // Predicated region
      $region49: #{tpu_custom_call.1} parent=5 // pred_check
        %p932 = pneg %p931
      $region50: #{tpu_custom_call.1} parent=5 // pred_check_branch
        %934 = sbr.rel (%p932) target = $region52
      $region51: #{tpu_custom_call.1} parent=5 // pred_region
        %s935 = ssub.s32 %s16, 2
        // Predicated region
        $region53: #{tpu_custom_call.1} parent=51 // pred_check
          %p936 = pneg %p158
        $region54: #{tpu_custom_call.1} parent=51 // pred_check_branch
          %938 = sbr.rel (%p936) target = $region56
        $region55: #{tpu_custom_call.1} parent=51 // pred_region
          %s939 = sand.u32 %s143, 1
          %s940 = scalar_lea.sflag [#allocation4], %s939
          %s941 = sand.u32 %s143, 1
          %s942 = smul.addr %s941, 128
          %s943 = scalar_lea.vmem [#allocation8], %s942
          %944 = dma.done %s940, 2048
        $region56: #{tpu_custom_call.1} parent=51 // pred_fallthru
          _
      $region52: #{tpu_custom_call.1} parent=5 // pred_fallthru
        _
    $region6: #{tpu_custom_call.1} parent=1 // loop_footer
      %s20 = sadd.s32 1, %s16
    $region7: #{tpu_custom_call.1} parent=1 // loop_footer_branch
      %15 = sbr.rel target = $region3
    $region8: #{tpu_custom_call.1} parent=1 // loop_exit
      _
    %945 = vsyncpa [#allocation3], 1
    %s946 = scalar_lea.sflag [#allocation3], 1
    %947 = vsyncpa %s946, 1
    %948 = vsyncpa [#allocation6], 1
    %949 = vsyncpa [#allocation4], 1
    %s950 = scalar_lea.sflag [#allocation4], 1
    %951 = vsyncpa %s950, 1

</llo_original>
